<compile_context>
chip_gen: v7x
topology: tpu7x:2x2x1
jax: 0.10.0
libtpu: 0.0.40
codegen_flags: <defaults>
</compile_context>

<pallas_src>
import jax
import jax.numpy as jnp
from jax import lax
from jax.experimental import pallas as pl
from jax.experimental.pallas import tpu as pltpu

EPS = 1e-5
LANE = 128


def _round_up(v, m):
    return (v + m - 1) // m * m


def _pick_tile_n(n):
    # Largest power-of-two tile (<=512 rows) that exactly divides N; otherwise
    # fall back to the full batch (single tile, still a legal full-dim block).
    for cand in (512, 256, 128, 64, 32, 16, 8):
        if n % cand == 0:
            return cand
    return n


def _make_kernel(inv_n):
    """inv_n = 1 / N (real batch size) baked in as a compile-time constant."""

    def kernel(s1_ref, sh1_ref, x_ref, w1_ref, g2_ref, bt2_ref, w2_ref,
               b2_ref, wr_ref, br_ref, o_ref,
               sum_sc, sumsq_sc, scale2_sc, shift2_sc):
        phase = pl.program_id(0)   # 0: accumulate BN2 stats, 1: produce output
        tile = pl.program_id(1)    # N tile

        # Stage 1 (needed in both phases):
        #   BN1 (pre-folded scale/shift) -> ReLU -> Linear1 (bf16 MXU, f32 acc).
        #   b1 is intentionally omitted: BN2's batch-mean subtraction cancels it.
        x = x_ref[...]
        a1 = jnp.maximum(x * s1_ref[...] + sh1_ref[...], 0.0)
        h = jnp.dot(a1.astype(jnp.bfloat16), w1_ref[...],
                    preferred_element_type=jnp.float32)

        @pl.when((phase == 0) & (tile == 0))
        def _init_stats():
            sum_sc[...] = jnp.zeros_like(sum_sc)
            sumsq_sc[...] = jnp.zeros_like(sumsq_sc)

        @pl.when(phase == 0)
        def _accumulate():
            sum_sc[...] += jnp.sum(h, axis=0, keepdims=True)
            sumsq_sc[...] += jnp.sum(h * h, axis=0, keepdims=True)
            # Deterministic placeholder; overwritten by phase 1 for this block.
            o_ref[...] = jnp.zeros_like(o_ref)

        @pl.when((phase == 1) & (tile == 0))
        def _finalize_stats():
            mean2 = sum_sc[...] * inv_n
            var2 = sumsq_sc[...] * inv_n - mean2 * mean2   # biased (training) var
            scale2 = g2_ref[...] * lax.rsqrt(var2 + EPS)
            scale2_sc[...] = scale2
            shift2_sc[...] = bt2_ref[...] - mean2 * scale2

        @pl.when(phase == 1)
        def _produce():
            # BN2 (folded scale/shift) -> ReLU -> Linear2.
            a2 = jnp.maximum(h * scale2_sc[...] + shift2_sc[...], 0.0)
            out = jnp.dot(a2.astype(jnp.bfloat16), w2_ref[...],
                          preferred_element_type=jnp.float32) + b2_ref[...]
            # Residual projection last: no (N, dout) value kept live across the
            # BN/matmul stages.
            res = jnp.dot(x.astype(jnp.bfloat16), wr_ref[...],
                          preferred_element_type=jnp.float32) + br_ref[...]
            o_ref[...] = (out + res).astype(o_ref.dtype)

    return kernel


def residual_block(x, gamma1, beta1, w1, b1, gamma2, beta2, w2, b2, wr, br):
    """ResidualBlock forward pass (training-mode BatchNorm).

    x: (N, dim_in).  Linear weights are pre-transposed to (in, out) so the
    kernel computes x @ W + b (== PyTorch x @ W.T + b).  BN params and biases
    are (1, F).  b1 is accepted for API parity but is mathematically cancelled
    by BatchNorm2's batch-mean subtraction and therefore unused.
    """
    del b1
    N, din = x.shape
    dout = w1.shape[1]
    din_p = _round_up(din, LANE)
    dout_p = _round_up(dout, LANE)
    tile_n = _pick_tile_n(N)
    n_tiles = N // tile_n

    f32 = jnp.float32
    xf = x.astype(f32)

    # BN1 batch statistics (cheap reduction over x) folded into scale/shift.
    mean1 = jnp.mean(xf, axis=0, keepdims=True)
    var1 = jnp.mean(jnp.square(xf - mean1), axis=0, keepdims=True)  # biased
    scale1 = gamma1.astype(f32) * lax.rsqrt(var1 + EPS)
    shift1 = beta1.astype(f32) - mean1 * scale1

    def pad_cols(a, cols):
        return jnp.pad(a, ((0, 0), (0, cols - a.shape[1])))

    def pad2(a, rows, cols):
        return jnp.pad(a, ((0, rows - a.shape[0]), (0, cols - a.shape[1])))

    # Zero padding keeps padded lanes exactly zero through every stage
    # (zero scale/gamma/weights/bias in the padded region).
    x_p = pad_cols(xf, din_p)
    s1_p = pad_cols(scale1, din_p)
    sh1_p = pad_cols(shift1, din_p)
    w1_p = pad2(w1.astype(f32), din_p, dout_p).astype(jnp.bfloat16)
    g2_p = pad_cols(gamma2.astype(f32), dout_p)
    bt2_p = pad_cols(beta2.astype(f32), dout_p)
    w2_p = pad2(w2.astype(f32), dout_p, dout_p).astype(jnp.bfloat16)
    b2_p = pad_cols(b2.astype(f32), dout_p)
    wr_p = pad2(wr.astype(f32), din_p, dout_p).astype(jnp.bfloat16)
    br_p = pad_cols(br.astype(f32), dout_p)

    vec = lambda cols: pl.BlockSpec((1, cols), lambda p, t: (0, 0))
    full = lambda r, c: pl.BlockSpec((r, c), lambda p, t: (0, 0))

    grid_spec = pltpu.PrefetchScalarGridSpec(
        num_scalar_prefetch=0,
        grid=(2, n_tiles),                     # (phase, N tile)
        in_specs=[
            vec(din_p), vec(din_p),                               # scale1, shift1
            pl.BlockSpec((tile_n, din_p), lambda p, t: (t, 0)),   # x tile
            full(din_p, dout_p),                                  # w1 (bf16, resident)
            vec(dout_p), vec(dout_p),                             # gamma2, beta2
            full(dout_p, dout_p),                                 # w2 (bf16, resident)
            vec(dout_p),                                          # b2
            full(din_p, dout_p),                                  # wr (bf16, resident)
            vec(dout_p),                                          # br
        ],
        out_specs=pl.BlockSpec((tile_n, dout_p), lambda p, t: (t, 0)),
        scratch_shapes=[pltpu.VMEM((1, dout_p), f32)] * 4,        # sum, sumsq, scale2, shift2
    )

    out_p = pl.pallas_call(
        _make_kernel(1.0 / N),
        out_shape=jax.ShapeDtypeStruct((N, dout_p), f32),
        grid_spec=grid_spec,
        compiler_params=pltpu.CompilerParams(
            # Both axes "arbitrary": BN2 statistics are carried across the N-tile
            # axis in VMEM scratch, so it cannot be megacore-sharded.
            dimension_semantics=("arbitrary", "arbitrary"),
            vmem_limit_bytes=32 * 1024 * 1024,
        ),
    )(s1_p, sh1_p, x_p, w1_p, g2_p, bt2_p, w2_p, b2_p, wr_p, br_p)

    return out_p[:, :dout].astype(x.dtype)


def _reference(x, gamma1, beta1, w1, b1, gamma2, beta2, w2, b2, wr, br):
    """Exact f32 reference matching the PyTorch module (training-mode BN)."""
    residual = x @ wr + br
    m = x.mean(0, keepdims=True)
    v = ((x - m) ** 2).mean(0, keepdims=True)
    h = (x - m) / jnp.sqrt(v + EPS) * gamma1 + beta1
    h = jnp.maximum(h, 0.0)
    h = h @ w1 + b1
    m = h.mean(0, keepdims=True)
    v = ((h - m) ** 2).mean(0, keepdims=True)
    h = (h - m) / jnp.sqrt(v + EPS) * gamma2 + beta2
    h = jnp.maximum(h, 0.0)
    h = h @ w2 + b2
    return h + residual


if __name__ == "__main__":
    key = jax.random.PRNGKey(0)
    N, dim_in, dim_out = 8, 32, 64
    ks = jax.random.split(key, 7)

    x = jax.random.normal(ks[0], (N, dim_in), jnp.float32)

    # BatchNorm1d default init: weight=1, bias=0
    gamma1 = jnp.ones((1, dim_in), jnp.float32)
    beta1 = jnp.zeros((1, dim_in), jnp.float32)
    gamma2 = jnp.ones((1, dim_out), jnp.float32)
    beta2 = jnp.zeros((1, dim_out), jnp.float32)

    # Linear params stored as (in, out); deterministic synthetic init
    w1 = 0.1 * jax.random.normal(ks[1], (dim_in, dim_out), jnp.float32)
    b1 = 0.1 * jax.random.normal(ks[2], (1, dim_out), jnp.float32)
    w2 = 0.1 * jax.random.normal(ks[3], (dim_out, dim_out), jnp.float32)
    b2 = 0.1 * jax.random.normal(ks[4], (1, dim_out), jnp.float32)
    wr = 0.1 * jax.random.normal(ks[5], (dim_in, dim_out), jnp.float32)
    br = 0.1 * jax.random.normal(ks[6], (1, dim_out), jnp.float32)

    out = residual_block(x, gamma1, beta1, w1, b1, gamma2, beta2, w2, b2, wr, br)
    out = jax.block_until_ready(out)

    ref = _reference(x, gamma1, beta1, w1, b1, gamma2, beta2, w2, b2, wr, br)
    assert out.shape == (N, dim_out)
    # Kernel uses bf16 MXU operands (f32 accumulation); exact-f32 reference
    # differs by bf16 rounding amplified through BN normalization (~1e-2).
    max_err = float(jnp.max(jnp.abs(out - ref)))
    assert jnp.allclose(out, ref, atol=5e-2, rtol=5e-2), \
        f"mismatch vs reference, max abs err = {max_err}"

    print("KERNEL_OK")
</pallas_src>

<mosaic_0001>
module attributes {stable_mosaic.version = 11 : i64} {
  func.func @kernel(%arg0: i32, %arg1: i32, %arg2: memref<1x128xf32, #tpu.memory_space<vmem>>, %arg3: memref<1x128xf32, #tpu.memory_space<vmem>>, %arg4: memref<8x128xf32, #tpu.memory_space<vmem>>, %arg5: memref<128x128xbf16, #tpu.memory_space<vmem>>, %arg6: memref<1x128xf32, #tpu.memory_space<vmem>>, %arg7: memref<1x128xf32, #tpu.memory_space<vmem>>, %arg8: memref<128x128xbf16, #tpu.memory_space<vmem>>, %arg9: memref<1x128xf32, #tpu.memory_space<vmem>>, %arg10: memref<128x128xbf16, #tpu.memory_space<vmem>>, %arg11: memref<1x128xf32, #tpu.memory_space<vmem>>, %arg12: memref<8x128xf32, #tpu.memory_space<vmem>>, %arg13: memref<1x128xf32, #tpu.memory_space<vmem>>, %arg14: memref<1x128xf32, #tpu.memory_space<vmem>>, %arg15: memref<1x128xf32, #tpu.memory_space<vmem>>, %arg16: memref<1x128xf32, #tpu.memory_space<vmem>>) attributes {dimension_semantics = [#tpu.dimension_semantics<arbitrary>, #tpu.dimension_semantics<arbitrary>], iteration_bounds = array<i64: 2, 1>, scalar_prefetch = 0 : i64, scratch_operands = 4 : i64, tpu.core_type = #tpu.core_type<tc>, window_params = [{pipeline_mode = #tpu.pipeline_mode<synchronous>, transform_indices = @transform_0, window_bounds = array<i64: 1, 128>}, {pipeline_mode = #tpu.pipeline_mode<synchronous>, transform_indices = @transform_1, window_bounds = array<i64: 1, 128>}, {transform_indices = @transform_2, window_bounds = array<i64: 8, 128>}, {pipeline_mode = #tpu.pipeline_mode<synchronous>, transform_indices = @transform_3, window_bounds = array<i64: 128, 128>}, {pipeline_mode = #tpu.pipeline_mode<synchronous>, transform_indices = @transform_4, window_bounds = array<i64: 1, 128>}, {pipeline_mode = #tpu.pipeline_mode<synchronous>, transform_indices = @transform_5, window_bounds = array<i64: 1, 128>}, {pipeline_mode = #tpu.pipeline_mode<synchronous>, transform_indices = @transform_6, window_bounds = array<i64: 128, 128>}, {pipeline_mode = #tpu.pipeline_mode<synchronous>, transform_indices = @transform_7, window_bounds = array<i64: 1, 128>}, {pipeline_mode = #tpu.pipeline_mode<synchronous>, transform_indices = @transform_8, window_bounds = array<i64: 128, 128>}, {pipeline_mode = #tpu.pipeline_mode<synchronous>, transform_indices = @transform_9, window_bounds = array<i64: 1, 128>}, {transform_indices = @transform_10, window_bounds = array<i64: 8, 128>}]} {
    %c0 = arith.constant 0 : index
    %c0_0 = arith.constant 0 : index
    %0 = vector.load %arg4[%c0, %c0_0] : memref<8x128xf32, #tpu.memory_space<vmem>>, vector<8x128xf32>
    %c0_1 = arith.constant 0 : index
    %c0_2 = arith.constant 0 : index
    %1 = vector.load %arg2[%c0_1, %c0_2] : memref<1x128xf32, #tpu.memory_space<vmem>>, vector<1x128xf32>
    %2 = vector.broadcast %1 : vector<1x128xf32> to vector<8x128xf32>
    %3 = arith.mulf %0, %2 : vector<8x128xf32>
    %c0_3 = arith.constant 0 : index
    %c0_4 = arith.constant 0 : index
    %4 = vector.load %arg3[%c0_3, %c0_4] : memref<1x128xf32, #tpu.memory_space<vmem>>, vector<1x128xf32>
    %5 = vector.broadcast %4 : vector<1x128xf32> to vector<8x128xf32>
    %6 = arith.addf %3, %5 : vector<8x128xf32>
    %cst = arith.constant 0.000000e+00 : f32
    %7 = vector.broadcast %cst : f32 to vector<8x128xf32>
    %8 = arith.maximumf %6, %7 : vector<8x128xf32>
    %9 = arith.truncf %8 : vector<8x128xf32> to vector<8x128xbf16>
    %c0_5 = arith.constant 0 : index
    %c0_6 = arith.constant 0 : index
    %10 = vector.load %arg5[%c0_5, %c0_6] : memref<128x128xbf16, #tpu.memory_space<vmem>>, vector<128x128xbf16>
    %cst_7 = arith.constant dense<0.000000e+00> : vector<8x128xf32>
    %11 = tpu.matmul %9, %10, %cst_7 {dimension_numbers = #tpu.dot_dimension_numbers<[1], [0], [0], [1], [0, 0, 1, 1], [], []>} : vector<8x128xbf16>, vector<128x128xbf16>, vector<8x128xf32> -> vector<8x128xf32>
    %c0_i32 = arith.constant 0 : i32
    %12 = arith.cmpi eq, %arg0, %c0_i32 : i32
    %c0_i32_8 = arith.constant 0 : i32
    %13 = arith.cmpi eq, %arg1, %c0_i32_8 : i32
    %14 = arith.andi %12, %13 : i1
    %15 = arith.extui %14 : i1 to i32
    %c0_i32_9 = arith.constant 0 : i32
    %16 = arith.cmpi ne, %15, %c0_i32_9 : i32
    scf.if %16 {
      %cst_16 = arith.constant 0.000000e+00 : f32
      %28 = vector.broadcast %cst_16 : f32 to vector<1x128xf32>
      %c0_17 = arith.constant 0 : index
      %c0_18 = arith.constant 0 : index
      %29 = vector.load %arg13[%c0_17, %c0_18] : memref<1x128xf32, #tpu.memory_space<vmem>>, vector<1x128xf32>
      tpu.vector_store %arg13[%c0_17, %c0_18], %28 {strides = array<i32>} : memref<1x128xf32, #tpu.memory_space<vmem>>, vector<1x128xf32>,
      %cst_19 = arith.constant 0.000000e+00 : f32
      %30 = vector.broadcast %cst_19 : f32 to vector<1x128xf32>
      %c0_20 = arith.constant 0 : index
      %c0_21 = arith.constant 0 : index
      %31 = vector.load %arg14[%c0_20, %c0_21] : memref<1x128xf32, #tpu.memory_space<vmem>>, vector<1x128xf32>
      tpu.vector_store %arg14[%c0_20, %c0_21], %30 {strides = array<i32>} : memref<1x128xf32, #tpu.memory_space<vmem>>, vector<1x128xf32>,
    } else {
    }
    %c0_i32_10 = arith.constant 0 : i32
    %17 = arith.cmpi eq, %arg0, %c0_i32_10 : i32
    %18 = arith.extui %17 : i1 to i32
    %c0_i32_11 = arith.constant 0 : i32
    %19 = arith.cmpi ne, %18, %c0_i32_11 : i32
    scf.if %19 {
      %c0_16 = arith.constant 0 : index
      %c0_17 = arith.constant 0 : index
      %28 = vector.load %arg13[%c0_16, %c0_17] : memref<1x128xf32, #tpu.memory_space<vmem>>, vector<1x128xf32>
      %cst_18 = arith.constant dense<0.000000e+00> : vector<128xf32>
      %29 = vector.multi_reduction <add>, %11, %cst_18 [0] : vector<8x128xf32> to vector<128xf32>
      %30 = vector.shape_cast %29 : vector<128xf32> to vector<1x128xf32>
      %31 = arith.addf %28, %30 : vector<1x128xf32>
      %c0_19 = arith.constant 0 : index
      %c0_20 = arith.constant 0 : index
      %32 = vector.load %arg13[%c0_19, %c0_20] : memref<1x128xf32, #tpu.memory_space<vmem>>, vector<1x128xf32>
      tpu.vector_store %arg13[%c0_19, %c0_20], %31 {strides = array<i32>} : memref<1x128xf32, #tpu.memory_space<vmem>>, vector<1x128xf32>,
      %c0_21 = arith.constant 0 : index
      %c0_22 = arith.constant 0 : index
      %33 = vector.load %arg14[%c0_21, %c0_22] : memref<1x128xf32, #tpu.memory_space<vmem>>, vector<1x128xf32>
      %34 = arith.mulf %11, %11 : vector<8x128xf32>
      %cst_23 = arith.constant dense<0.000000e+00> : vector<128xf32>
      %35 = vector.multi_reduction <add>, %34, %cst_23 [0] : vector<8x128xf32> to vector<128xf32>
      %36 = vector.shape_cast %35 : vector<128xf32> to vector<1x128xf32>
      %37 = arith.addf %33, %36 : vector<1x128xf32>
      %c0_24 = arith.constant 0 : index
      %c0_25 = arith.constant 0 : index
      %38 = vector.load %arg14[%c0_24, %c0_25] : memref<1x128xf32, #tpu.memory_space<vmem>>, vector<1x128xf32>
      tpu.vector_store %arg14[%c0_24, %c0_25], %37 {strides = array<i32>} : memref<1x128xf32, #tpu.memory_space<vmem>>, vector<1x128xf32>,
      %cst_26 = arith.constant 0.000000e+00 : f32
      %39 = vector.broadcast %cst_26 : f32 to vector<8x128xf32>
      %c0_27 = arith.constant 0 : index
      %c0_28 = arith.constant 0 : index
      %40 = vector.load %arg12[%c0_27, %c0_28] : memref<8x128xf32, #tpu.memory_space<vmem>>, vector<8x128xf32>
      tpu.vector_store %arg12[%c0_27, %c0_28], %39 {strides = array<i32>} : memref<8x128xf32, #tpu.memory_space<vmem>>, vector<8x128xf32>,
    } else {
    }
    %c1_i32 = arith.constant 1 : i32
    %20 = arith.cmpi eq, %arg0, %c1_i32 : i32
    %c0_i32_12 = arith.constant 0 : i32
    %21 = arith.cmpi eq, %arg1, %c0_i32_12 : i32
    %22 = arith.andi %20, %21 : i1
    %23 = arith.extui %22 : i1 to i32
    %c0_i32_13 = arith.constant 0 : i32
    %24 = arith.cmpi ne, %23, %c0_i32_13 : i32
    scf.if %24 {
      %c0_16 = arith.constant 0 : index
      %c0_17 = arith.constant 0 : index
      %28 = vector.load %arg13[%c0_16, %c0_17] : memref<1x128xf32, #tpu.memory_space<vmem>>, vector<1x128xf32>
      %cst_18 = arith.constant 1.250000e-01 : f32
      %29 = vector.broadcast %cst_18 : f32 to vector<1x128xf32>
      %30 = arith.mulf %28, %29 : vector<1x128xf32>
      %c0_19 = arith.constant 0 : index
      %c0_20 = arith.constant 0 : index
      %31 = vector.load %arg14[%c0_19, %c0_20] : memref<1x128xf32, #tpu.memory_space<vmem>>, vector<1x128xf32>
      %cst_21 = arith.constant 1.250000e-01 : f32
      %32 = vector.broadcast %cst_21 : f32 to vector<1x128xf32>
      %33 = arith.mulf %31, %32 : vector<1x128xf32>
      %34 = arith.mulf %30, %30 : vector<1x128xf32>
      %35 = arith.subf %33, %34 : vector<1x128xf32>
      %c0_22 = arith.constant 0 : index
      %c0_23 = arith.constant 0 : index
      %36 = vector.load %arg6[%c0_22, %c0_23] : memref<1x128xf32, #tpu.memory_space<vmem>>, vector<1x128xf32>
      %cst_24 = arith.constant 9.99999974E-6 : f32
      %37 = vector.broadcast %cst_24 : f32 to vector<1x128xf32>
      %38 = arith.addf %35, %37 : vector<1x128xf32>
      %39 = math.rsqrt %38 : vector<1x128xf32>
      %40 = arith.mulf %36, %39 : vector<1x128xf32>
      %c0_25 = arith.constant 0 : index
      %c0_26 = arith.constant 0 : index
      %41 = vector.load %arg15[%c0_25, %c0_26] : memref<1x128xf32, #tpu.memory_space<vmem>>, vector<1x128xf32>
      tpu.vector_store %arg15[%c0_25, %c0_26], %40 {strides = array<i32>} : memref<1x128xf32, #tpu.memory_space<vmem>>, vector<1x128xf32>,
      %c0_27 = arith.constant 0 : index
      %c0_28 = arith.constant 0 : index
      %42 = vector.load %arg7[%c0_27, %c0_28] : memref<1x128xf32, #tpu.memory_space<vmem>>, vector<1x128xf32>
      %43 = arith.mulf %30, %40 : vector<1x128xf32>
      %44 = arith.subf %42, %43 : vector<1x128xf32>
      %c0_29 = arith.constant 0 : index
      %c0_30 = arith.constant 0 : index
      %45 = vector.load %arg16[%c0_29, %c0_30] : memref<1x128xf32, #tpu.memory_space<vmem>>, vector<1x128xf32>
      tpu.vector_store %arg16[%c0_29, %c0_30], %44 {strides = array<i32>} : memref<1x128xf32, #tpu.memory_space<vmem>>, vector<1x128xf32>,
    } else {
    }
    %c1_i32_14 = arith.constant 1 : i32
    %25 = arith.cmpi eq, %arg0, %c1_i32_14 : i32
    %26 = arith.extui %25 : i1 to i32
    %c0_i32_15 = arith.constant 0 : i32
    %27 = arith.cmpi ne, %26, %c0_i32_15 : i32
    scf.if %27 {
      %c0_16 = arith.constant 0 : index
      %c0_17 = arith.constant 0 : index
      %28 = vector.load %arg15[%c0_16, %c0_17] : memref<1x128xf32, #tpu.memory_space<vmem>>, vector<1x128xf32>
      %29 = vector.broadcast %28 : vector<1x128xf32> to vector<8x128xf32>
      %30 = arith.mulf %11, %29 : vector<8x128xf32>
      %c0_18 = arith.constant 0 : index
      %c0_19 = arith.constant 0 : index
      %31 = vector.load %arg16[%c0_18, %c0_19] : memref<1x128xf32, #tpu.memory_space<vmem>>, vector<1x128xf32>
      %32 = vector.broadcast %31 : vector<1x128xf32> to vector<8x128xf32>
      %33 = arith.addf %30, %32 : vector<8x128xf32>
      %cst_20 = arith.constant 0.000000e+00 : f32
      %34 = vector.broadcast %cst_20 : f32 to vector<8x128xf32>
      %35 = arith.maximumf %33, %34 : vector<8x128xf32>
      %36 = arith.truncf %35 : vector<8x128xf32> to vector<8x128xbf16>
      %c0_21 = arith.constant 0 : index
      %c0_22 = arith.constant 0 : index
      %37 = vector.load %arg8[%c0_21, %c0_22] : memref<128x128xbf16, #tpu.memory_space<vmem>>, vector<128x128xbf16>
      %cst_23 = arith.constant dense<0.000000e+00> : vector<8x128xf32>
      %38 = tpu.matmul %36, %37, %cst_23 {dimension_numbers = #tpu.dot_dimension_numbers<[1], [0], [0], [1], [0, 0, 1, 1], [], []>} : vector<8x128xbf16>, vector<128x128xbf16>, vector<8x128xf32> -> vector<8x128xf32>
      %c0_24 = arith.constant 0 : index
      %c0_25 = arith.constant 0 : index
      %39 = vector.load %arg9[%c0_24, %c0_25] : memref<1x128xf32, #tpu.memory_space<vmem>>, vector<1x128xf32>
      %40 = vector.broadcast %39 : vector<1x128xf32> to vector<8x128xf32>
      %41 = arith.addf %38, %40 : vector<8x128xf32>
      %42 = arith.truncf %0 : vector<8x128xf32> to vector<8x128xbf16>
      %c0_26 = arith.constant 0 : index
      %c0_27 = arith.constant 0 : index
      %43 = vector.load %arg10[%c0_26, %c0_27] : memref<128x128xbf16, #tpu.memory_space<vmem>>, vector<128x128xbf16>
      %cst_28 = arith.constant dense<0.000000e+00> : vector<8x128xf32>
      %44 = tpu.matmul %42, %43, %cst_28 {dimension_numbers = #tpu.dot_dimension_numbers<[1], [0], [0], [1], [0, 0, 1, 1], [], []>} : vector<8x128xbf16>, vector<128x128xbf16>, vector<8x128xf32> -> vector<8x128xf32>
      %c0_29 = arith.constant 0 : index
      %c0_30 = arith.constant 0 : index
      %45 = vector.load %arg11[%c0_29, %c0_30] : memref<1x128xf32, #tpu.memory_space<vmem>>, vector<1x128xf32>
      %46 = vector.broadcast %45 : vector<1x128xf32> to vector<8x128xf32>
      %47 = arith.addf %44, %46 : vector<8x128xf32>
      %48 = arith.addf %41, %47 : vector<8x128xf32>
      %c0_31 = arith.constant 0 : index
      %c0_32 = arith.constant 0 : index
      %49 = vector.load %arg12[%c0_31, %c0_32] : memref<8x128xf32, #tpu.memory_space<vmem>>, vector<8x128xf32>
      tpu.vector_store %arg12[%c0_31, %c0_32], %48 {strides = array<i32>} : memref<8x128xf32, #tpu.memory_space<vmem>>, vector<8x128xf32>,
    } else {
    }
    return
  }
  func.func @transform_0(%arg0: i32, %arg1: i32) -> (i32, i32) {
    %c0_i32 = arith.constant 0 : i32
    %c0_i32_0 = arith.constant 0 : i32
    %c0_i32_1 = arith.constant 0 : i32
    return %c0_i32, %c0_i32_0 : i32, i32
  }
  func.func @transform_1(%arg0: i32, %arg1: i32) -> (i32, i32) {
    %c0_i32 = arith.constant 0 : i32
    %c0_i32_0 = arith.constant 0 : i32
    %c0_i32_1 = arith.constant 0 : i32
    return %c0_i32, %c0_i32_0 : i32, i32
  }
  func.func @transform_2(%arg0: i32, %arg1: i32) -> (i32, i32) {
    %c0_i32 = arith.constant 0 : i32
    %c0_i32_0 = arith.constant 0 : i32
    return %arg1, %c0_i32 : i32, i32
  }
  func.func @transform_3(%arg0: i32, %arg1: i32) -> (i32, i32) {
    %c0_i32 = arith.constant 0 : i32
    %c0_i32_0 = arith.constant 0 : i32
    %c0_i32_1 = arith.constant 0 : i32
    return %c0_i32, %c0_i32_0 : i32, i32
  }
  func.func @transform_4(%arg0: i32, %arg1: i32) -> (i32, i32) {
    %c0_i32 = arith.constant 0 : i32
    %c0_i32_0 = arith.constant 0 : i32
    %c0_i32_1 = arith.constant 0 : i32
    return %c0_i32, %c0_i32_0 : i32, i32
  }
  func.func @transform_5(%arg0: i32, %arg1: i32) -> (i32, i32) {
    %c0_i32 = arith.constant 0 : i32
    %c0_i32_0 = arith.constant 0 : i32
    %c0_i32_1 = arith.constant 0 : i32
    return %c0_i32, %c0_i32_0 : i32, i32
  }
  func.func @transform_6(%arg0: i32, %arg1: i32) -> (i32, i32) {
    %c0_i32 = arith.constant 0 : i32
    %c0_i32_0 = arith.constant 0 : i32
    %c0_i32_1 = arith.constant 0 : i32
    return %c0_i32, %c0_i32_0 : i32, i32
  }
  func.func @transform_7(%arg0: i32, %arg1: i32) -> (i32, i32) {
    %c0_i32 = arith.constant 0 : i32
    %c0_i32_0 = arith.constant 0 : i32
    %c0_i32_1 = arith.constant 0 : i32
    return %c0_i32, %c0_i32_0 : i32, i32
  }
  func.func @transform_8(%arg0: i32, %arg1: i32) -> (i32, i32) {
    %c0_i32 = arith.constant 0 : i32
    %c0_i32_0 = arith.constant 0 : i32
    %c0_i32_1 = arith.constant 0 : i32
    return %c0_i32, %c0_i32_0 : i32, i32
  }
  func.func @transform_9(%arg0: i32, %arg1: i32) -> (i32, i32) {
    %c0_i32 = arith.constant 0 : i32
    %c0_i32_0 = arith.constant 0 : i32
    %c0_i32_1 = arith.constant 0 : i32
    return %c0_i32, %c0_i32_0 : i32, i32
  }
  func.func @transform_10(%arg0: i32, %arg1: i32) -> (i32, i32) {
    %c0_i32 = arith.constant 0 : i32
    %c0_i32_0 = arith.constant 0 : i32
    return %arg1, %c0_i32 : i32, i32
  }
}

</mosaic_0001>

<llo_original>
// kernel: tpu_custom_call.1
$region0: #{tpu_custom_call.1}
  #allocation0 [shape = 'u32[]', space=smem, size = 0x4, offset = 0x4, fixed_abs, tag = 'smem constant byte address 0x4 - core index']
  #allocation1 [shape = 'u32[144,128]{1,0:T(1,128)}', space=vmem, size = 0x12000, scoped, tag = 'internal scratch']
  #allocation2 [shape = 'f32[1,128]{1,0:T(1,128)}', space=vmem, size = 0x200, scoped, tag = 'scratch operand']
  #allocation3 [shape = 'f32[1,128]{1,0:T(1,128)}', space=vmem, size = 0x200, scoped, tag = 'scratch operand']
  #allocation4 [shape = 'f32[1,128]{1,0:T(1,128)}', space=vmem, size = 0x200, scoped, tag = 'scratch operand']
  #allocation5 [shape = 'f32[1,128]{1,0:T(1,128)}', space=vmem, size = 0x200, scoped, tag = 'scratch operand']
  %s0 = inlined_call_operand.hbm [shape: f32[1,128], index: 0, kind: input, shape index: {}]
  %s1 = inlined_call_operand.vmem [shape: f32[1,128], index: 1, kind: input, shape index: {}]
  %s2 = inlined_call_operand.hbm [shape: f32[8,128], index: 2, kind: input, shape index: {}]
  %s3 = inlined_call_operand.hbm [shape: bf16[128,128], index: 3, kind: input, shape index: {}]
  %s4 = inlined_call_operand.vmem [shape: f32[1,128], index: 4, kind: input, shape index: {}]
  %s5 = inlined_call_operand.vmem [shape: f32[1,128], index: 5, kind: input, shape index: {}]
  %s6 = inlined_call_operand.hbm [shape: bf16[128,128], index: 6, kind: input, shape index: {}]
  %s7 = inlined_call_operand.vmem [shape: f32[1,128], index: 7, kind: input, shape index: {}]
  %s8 = inlined_call_operand.hbm [shape: bf16[128,128], index: 8, kind: input, shape index: {}]
  %s9 = inlined_call_operand.vmem [shape: f32[1,128], index: 9, kind: input, shape index: {}]
  %s10 = inlined_call_operand.hbm [shape: f32[8,128], index: 10, kind: output, shape index: {}]
  %s11 = sld [smem:[#allocation0]]
  $region109: #{tpu_custom_call.1} parent=0
    _
  %s13 = ssub.s32 1, %s11
  %s14 = scalar_select 0, %s13, %s11
  $region1: #{tpu_custom_call.1} parent=0
    #allocation6 [shape = 'u8[512]{0}', space=vmem, size = 0x400, scoped, tag = 'input window, operand 0, single buffered']
    #allocation7 [shape = 's32[2]{0}', space=sflag, size = 0x8, scoped, tag = 'scoped memory for tpu_custom_call.1']
    #allocation8 [shape = 's32[2]{0}', space=sflag, size = 0x8, scoped, tag = 'scoped memory for tpu_custom_call.1']
    #allocation9 [shape = 'u8[4096]{0}', space=vmem, size = 0x1000, scoped, tag = 'input window, operand 2, single buffered']
    #allocation10 [shape = 's32[1]{0}', space=sflag, size = 0x4, scoped, tag = 'scoped memory for tpu_custom_call.1']
    #allocation11 [shape = 'u8[32768]{0}', space=vmem, size = 0x8000, scoped, tag = 'input window, operand 3, single buffered']
    #allocation12 [shape = 'u8[32768]{0}', space=vmem, size = 0x8000, scoped, tag = 'input window, operand 6, single buffered']
    #allocation13 [shape = 's32[1]{0}', space=sflag, size = 0x4, scoped, tag = 'scoped memory for tpu_custom_call.1']
    #allocation14 [shape = 'u8[32768]{0}', space=vmem, size = 0x8000, scoped, tag = 'input window, operand 8, single buffered']
    #allocation15 [shape = 'u8[4096]{0}', space=vmem, size = 0x1000, scoped, tag = 'output window, operand 0, single buffered']
    %15 = vsyncpa [#allocation7], 0
    %16 = vsyncpa [#allocation10], 0
    %17 = vsyncpa [#allocation13], 0
    %18 = vsyncpa [#allocation8], 0
    loop: start=0, step=1, limit=4
    $region2: #{tpu_custom_call.1} parent=1 // loop_pre_header
      _
    $region3: #{tpu_custom_call.1} parent=1 // loop_header
      %s20 = sphi 0, %s24
      %p21 = scmp.ge.s32.totalorder %s20, 4
      %s27 = sphi 0, %s39
      %s28 = sphi 0, %s35
      %s29 = sphi 0, %s27
      %s30 = sphi 0, %s28
      %s31 = sphi 0, %s29
      %s32 = sphi 0, %s30
      %s40 = sphi 0, %s40
      %s42 = sphi 0, %s40
      %s43 = sphi 0, %s42
      %s57 = sphi 0, %s43
      %s61 = sphi 0, %s61
      %s63 = sphi 0, %s61
      %s64 = sphi 0, %s63
      %s78 = sphi 0, %s64
      %s84 = sphi 0, %s86
      %s87 = sphi 0, %s84
      %s88 = sphi 0, %s87
      %s104 = sphi 0, %s88
      %s108 = sphi 0, %s108
      %s110 = sphi 0, %s108
      %s111 = sphi 0, %s110
      %s125 = sphi 0, %s111
      %s129 = sphi 0, %s129
      %s131 = sphi 0, %s129
      %s132 = sphi 0, %s131
      %s146 = sphi 0, %s132
      %s150 = sphi 0, %s150
      %s152 = sphi 0, %s150
      %s153 = sphi 0, %s152
      %s167 = sphi 0, %s153
      %s171 = sphi 0, %s171
      %s173 = sphi 0, %s171
      %s174 = sphi 0, %s173
      %s188 = sphi 0, %s174
      %s192 = sphi 0, %s192
      %s194 = sphi 0, %s192
      %s195 = sphi 0, %s194
      %s209 = sphi 0, %s195
      %s213 = sphi 0, %s213
      %s215 = sphi 0, %s213
      %s216 = sphi 0, %s215
      %s230 = sphi 0, %s216
      %s234 = sphi 0, %s234
      %s236 = sphi 0, %s234
      %s237 = sphi 0, %s236
      %s251 = sphi 0, %s237
      %s257 = sphi 0, %s259
      %s260 = sphi 0, %s257
      %s261 = sphi 0, %s260
      %s277 = sphi 0, %s261
    $region4: #{tpu_custom_call.1} parent=1 // loop_header_branch
      %23 = sbr.rel (%p21) target = $region8
    $region5: #{tpu_custom_call.1} parent=1 // loop_body
      %s25 = ssub.s32 %s20, 1
      %s26 = ssub.s32 %s20, 2
      %s33 = sadd.s32 1, %s28
      %p34 = scmp.ge.s32.totalorder %s33, 1
      %s35 = scalar_select %p34, 0, %s33
      %s36 = sadd.s32 1, %s27
      %s37 = scalar_select %p34, %s36, %s27
      %p38 = scmp.ge.s32.totalorder %s37, 2
      %s39 = scalar_select %p38, 0, %s37
      %s41 = sadd.s32 %s40, 1
      %p44 = scmp.eq.s32.totalorder %s20, 1
      %p45 = scmp.ne.s32.totalorder %s40, %s42
      %p46 = scmp.eq.s32.totalorder %s20, 0
      %p47 = por %p45, %p46
      %p48 = scmp.ne.s32.totalorder %s40, %s42
      %p49 = scmp.eq.s32.totalorder %s25, 1
      %p50 = por %p48, %p49
      %p51 = scmp.ne.s32.totalorder %s42, %s43
      %p52 = scmp.eq.s32.totalorder %s25, 0
      %p53 = por %p51, %p52
      %p54 = scmp.ne.s32.totalorder %s42, %s43
      %p55 = scmp.eq.s32.totalorder %s26, 1
      %p56 = por %p54, %p55
      %p58 = scmp.ne.s32.totalorder %s43, %s57
      %p59 = scmp.eq.s32.totalorder %s26, 0
      %p60 = por %p58, %p59
      %s62 = sadd.s32 %s61, 1
      %p65 = scmp.eq.s32.totalorder %s20, 1
      %p66 = scmp.ne.s32.totalorder %s61, %s63
      %p67 = scmp.eq.s32.totalorder %s20, 0
      %p68 = por %p66, %p67
      %p69 = scmp.ne.s32.totalorder %s61, %s63
      %p70 = scmp.eq.s32.totalorder %s25, 1
      %p71 = por %p69, %p70
      %p72 = scmp.ne.s32.totalorder %s63, %s64
      %p73 = scmp.eq.s32.totalorder %s25, 0
      %p74 = por %p72, %p73
      %p75 = scmp.ne.s32.totalorder %s63, %s64
      %p76 = scmp.eq.s32.totalorder %s26, 1
      %p77 = por %p75, %p76
      %p79 = scmp.ne.s32.totalorder %s64, %s78
      %p80 = scmp.eq.s32.totalorder %s26, 0
      %p81 = por %p79, %p80
      %s82 = ssub.s32 %s28, %s35
      %p83 = scmp.eq.s32.totalorder %s82, 0
      %s85 = sadd.s32 %s84, 1
      %s86 = scalar_select %p83, %s84, %s85
      %p89 = pneg %p83
      %p90 = scmp.eq.s32.totalorder %s20, 1
      %p91 = por %p89, %p90
      %p92 = scmp.ne.s32.totalorder %s84, %s87
      %p93 = scmp.eq.s32.totalorder %s20, 0
      %p94 = por %p92, %p93
      %p95 = scmp.ne.s32.totalorder %s84, %s87
      %p96 = scmp.eq.s32.totalorder %s25, 1
      %p97 = por %p95, %p96
      %p98 = scmp.ne.s32.totalorder %s87, %s88
      %p99 = scmp.eq.s32.totalorder %s25, 0
      %p100 = por %p98, %p99
      %p101 = scmp.ne.s32.totalorder %s87, %s88
      %p102 = scmp.eq.s32.totalorder %s26, 1
      %p103 = por %p101, %p102
      %p105 = scmp.ne.s32.totalorder %s88, %s104
      %p106 = scmp.eq.s32.totalorder %s26, 0
      %p107 = por %p105, %p106
      %s109 = sadd.s32 %s108, 1
      %p112 = scmp.eq.s32.totalorder %s20, 1
      %p113 = scmp.ne.s32.totalorder %s108, %s110
      %p114 = scmp.eq.s32.totalorder %s20, 0
      %p115 = por %p113, %p114
      %p116 = scmp.ne.s32.totalorder %s108, %s110
      %p117 = scmp.eq.s32.totalorder %s25, 1
      %p118 = por %p116, %p117
      %p119 = scmp.ne.s32.totalorder %s110, %s111
      %p120 = scmp.eq.s32.totalorder %s25, 0
      %p121 = por %p119, %p120
      %p122 = scmp.ne.s32.totalorder %s110, %s111
      %p123 = scmp.eq.s32.totalorder %s26, 1
      %p124 = por %p122, %p123
      %p126 = scmp.ne.s32.totalorder %s111, %s125
      %p127 = scmp.eq.s32.totalorder %s26, 0
      %p128 = por %p126, %p127
      %s130 = sadd.s32 %s129, 1
      %p133 = scmp.eq.s32.totalorder %s20, 1
      %p134 = scmp.ne.s32.totalorder %s129, %s131
      %p135 = scmp.eq.s32.totalorder %s20, 0
      %p136 = por %p134, %p135
      %p137 = scmp.ne.s32.totalorder %s129, %s131
      %p138 = scmp.eq.s32.totalorder %s25, 1
      %p139 = por %p137, %p138
      %p140 = scmp.ne.s32.totalorder %s131, %s132
      %p141 = scmp.eq.s32.totalorder %s25, 0
      %p142 = por %p140, %p141
      %p143 = scmp.ne.s32.totalorder %s131, %s132
      %p144 = scmp.eq.s32.totalorder %s26, 1
      %p145 = por %p143, %p144
      %p147 = scmp.ne.s32.totalorder %s132, %s146
      %p148 = scmp.eq.s32.totalorder %s26, 0
      %p149 = por %p147, %p148
      %s151 = sadd.s32 %s150, 1
      %p154 = scmp.eq.s32.totalorder %s20, 1
      %p155 = scmp.ne.s32.totalorder %s150, %s152
      %p156 = scmp.eq.s32.totalorder %s20, 0
      %p157 = por %p155, %p156
      %p158 = scmp.ne.s32.totalorder %s150, %s152
      %p159 = scmp.eq.s32.totalorder %s25, 1
      %p160 = por %p158, %p159
      %p161 = scmp.ne.s32.totalorder %s152, %s153
      %p162 = scmp.eq.s32.totalorder %s25, 0
      %p163 = por %p161, %p162
      %p164 = scmp.ne.s32.totalorder %s152, %s153
      %p165 = scmp.eq.s32.totalorder %s26, 1
      %p166 = por %p164, %p165
      %p168 = scmp.ne.s32.totalorder %s153, %s167
      %p169 = scmp.eq.s32.totalorder %s26, 0
      %p170 = por %p168, %p169
      %s172 = sadd.s32 %s171, 1
      %p175 = scmp.eq.s32.totalorder %s20, 1
      %p176 = scmp.ne.s32.totalorder %s171, %s173
      %p177 = scmp.eq.s32.totalorder %s20, 0
      %p178 = por %p176, %p177
      %p179 = scmp.ne.s32.totalorder %s171, %s173
      %p180 = scmp.eq.s32.totalorder %s25, 1
      %p181 = por %p179, %p180
      %p182 = scmp.ne.s32.totalorder %s173, %s174
      %p183 = scmp.eq.s32.totalorder %s25, 0
      %p184 = por %p182, %p183
      %p185 = scmp.ne.s32.totalorder %s173, %s174
      %p186 = scmp.eq.s32.totalorder %s26, 1
      %p187 = por %p185, %p186
      %p189 = scmp.ne.s32.totalorder %s174, %s188
      %p190 = scmp.eq.s32.totalorder %s26, 0
      %p191 = por %p189, %p190
      %s193 = sadd.s32 %s192, 1
      %p196 = scmp.eq.s32.totalorder %s20, 1
      %p197 = scmp.ne.s32.totalorder %s192, %s194
      %p198 = scmp.eq.s32.totalorder %s20, 0
      %p199 = por %p197, %p198
      %p200 = scmp.ne.s32.totalorder %s192, %s194
      %p201 = scmp.eq.s32.totalorder %s25, 1
      %p202 = por %p200, %p201
      %p203 = scmp.ne.s32.totalorder %s194, %s195
      %p204 = scmp.eq.s32.totalorder %s25, 0
      %p205 = por %p203, %p204
      %p206 = scmp.ne.s32.totalorder %s194, %s195
      %p207 = scmp.eq.s32.totalorder %s26, 1
      %p208 = por %p206, %p207
      %p210 = scmp.ne.s32.totalorder %s195, %s209
      %p211 = scmp.eq.s32.totalorder %s26, 0
      %p212 = por %p210, %p211
      %s214 = sadd.s32 %s213, 1
      %p217 = scmp.eq.s32.totalorder %s20, 1
      %p218 = scmp.ne.s32.totalorder %s213, %s215
      %p219 = scmp.eq.s32.totalorder %s20, 0
      %p220 = por %p218, %p219
      %p221 = scmp.ne.s32.totalorder %s213, %s215
      %p222 = scmp.eq.s32.totalorder %s25, 1
      %p223 = por %p221, %p222
      %p224 = scmp.ne.s32.totalorder %s215, %s216
      %p225 = scmp.eq.s32.totalorder %s25, 0
      %p226 = por %p224, %p225
      %p227 = scmp.ne.s32.totalorder %s215, %s216
      %p228 = scmp.eq.s32.totalorder %s26, 1
      %p229 = por %p227, %p228
      %p231 = scmp.ne.s32.totalorder %s216, %s230
      %p232 = scmp.eq.s32.totalorder %s26, 0
      %p233 = por %p231, %p232
      %s235 = sadd.s32 %s234, 1
      %p238 = scmp.eq.s32.totalorder %s20, 1
      %p239 = scmp.ne.s32.totalorder %s234, %s236
      %p240 = scmp.eq.s32.totalorder %s20, 0
      %p241 = por %p239, %p240
      %p242 = scmp.ne.s32.totalorder %s234, %s236
      %p243 = scmp.eq.s32.totalorder %s25, 1
      %p244 = por %p242, %p243
      %p245 = scmp.ne.s32.totalorder %s236, %s237
      %p246 = scmp.eq.s32.totalorder %s25, 0
      %p247 = por %p245, %p246
      %p248 = scmp.ne.s32.totalorder %s236, %s237
      %p249 = scmp.eq.s32.totalorder %s26, 1
      %p250 = por %p248, %p249
      %p252 = scmp.ne.s32.totalorder %s237, %s251
      %p253 = scmp.eq.s32.totalorder %s26, 0
      %p254 = por %p252, %p253
      %s255 = ssub.s32 %s28, %s35
      %p256 = scmp.eq.s32.totalorder %s255, 0
      %s258 = sadd.s32 %s257, 1
      %s259 = scalar_select %p256, %s257, %s258
      %p262 = pneg %p256
      %p263 = scmp.eq.s32.totalorder %s20, 1
      %p264 = por %p262, %p263
      %p265 = scmp.ne.s32.totalorder %s257, %s260
      %p266 = scmp.eq.s32.totalorder %s20, 0
      %p267 = por %p265, %p266
      %p268 = scmp.ne.s32.totalorder %s257, %s260
      %p269 = scmp.eq.s32.totalorder %s25, 1
      %p270 = por %p268, %p269
      %p271 = scmp.ne.s32.totalorder %s260, %s261
      %p272 = scmp.eq.s32.totalorder %s25, 0
      %p273 = por %p271, %p272
      %p274 = scmp.ne.s32.totalorder %s260, %s261
      %p275 = scmp.eq.s32.totalorder %s26, 1
      %p276 = por %p274, %p275
      %p278 = scmp.ne.s32.totalorder %s261, %s277
      %p279 = scmp.eq.s32.totalorder %s26, 0
      %p280 = por %p278, %p279
      %p281 = scmp.le.s32.totalorder 1, %s20
      %p282 = scmp.lt.s32.totalorder %s20, 3
      %p283 = pnand %p281, %p282
      %p284 = pneg %p283
      // Predicated region
      $region9: #{tpu_custom_call.1} parent=5 // pred_check
        _
      $region10: #{tpu_custom_call.1} parent=5 // pred_check_branch
        %286 = sbr.rel (%p283) target = $region12
      $region11: #{tpu_custom_call.1} parent=5 // pred_region
        %s287 = ssub.s32 %s20, 1
        // Predicated region
        $region13: #{tpu_custom_call.1} parent=11 // pred_check
          %p288 = pneg %p53
        $region14: #{tpu_custom_call.1} parent=11 // pred_check_branch
          %290 = sbr.rel (%p288) target = $region16
        $region15: #{tpu_custom_call.1} parent=11 // pred_region
          %s292 = ssub.s32 16, 16
          %293 = vsyncadd [#allocation7], %s292
          %s295 = sshll.u32 [#allocation6], 4
          %s296 = int_to_ptr.vmem [resolvable:$true] %s295
          %298 = dma.hbm_to_vmem [thread:$0]  %s0, 16, %s296, [#allocation7]
        $region16: #{tpu_custom_call.1} parent=11 // pred_fallthru
          _
        // Predicated region
        $region17: #{tpu_custom_call.1} parent=11 // pred_check
          %p299 = pneg %p74
        $region18: #{tpu_custom_call.1} parent=11 // pred_check_branch
          %301 = sbr.rel (%p299) target = $region20
        $region19: #{tpu_custom_call.1} parent=11 // pred_region
          _
        $region20: #{tpu_custom_call.1} parent=11 // pred_fallthru
          _
        // Predicated region
        $region21: #{tpu_custom_call.1} parent=11 // pred_check
          %p302 = pneg %p100
        $region22: #{tpu_custom_call.1} parent=11 // pred_check_branch
          %304 = sbr.rel (%p302) target = $region24
        $region23: #{tpu_custom_call.1} parent=11 // pred_region
          %s306 = ssub.s32 128, 128
          %307 = vsyncadd [#allocation10], %s306
          %s308 = smul.addr %s30, 128
          %s309 = scalar_lea.hbm %s2, %s308
          %s311 = sshll.u32 [#allocation9], 4
          %s312 = int_to_ptr.vmem [resolvable:$true] %s311
          %314 = dma.hbm_to_vmem [thread:$0]  %s309, 128, %s312, [#allocation10]
        $region24: #{tpu_custom_call.1} parent=11 // pred_fallthru
          _
        // Predicated region
        $region25: #{tpu_custom_call.1} parent=11 // pred_check
          %p315 = pneg %p121
        $region26: #{tpu_custom_call.1} parent=11 // pred_check_branch
          %317 = sbr.rel (%p315) target = $region28
        $region27: #{tpu_custom_call.1} parent=11 // pred_region
          %s319 = ssub.s32 1024, 1024
          %320 = vsyncadd [#allocation10], %s319
          %s321 = sshll.u32 [#allocation11], 4
          %s322 = int_to_ptr.vmem [resolvable:$true] %s321
          %327 = dma.hbm_to_vmem [thread:$0]  %s3, 1024, %s322, [#allocation10], 64, 64, 4
        $region28: #{tpu_custom_call.1} parent=11 // pred_fallthru
          _
        // Predicated region
        $region29: #{tpu_custom_call.1} parent=11 // pred_check
          %p328 = pneg %p142
        $region30: #{tpu_custom_call.1} parent=11 // pred_check_branch
          %330 = sbr.rel (%p328) target = $region32
        $region31: #{tpu_custom_call.1} parent=11 // pred_region
          _
        $region32: #{tpu_custom_call.1} parent=11 // pred_fallthru
          _
        // Predicated region
        $region33: #{tpu_custom_call.1} parent=11 // pred_check
          %p331 = pneg %p163
        $region34: #{tpu_custom_call.1} parent=11 // pred_check_branch
          %333 = sbr.rel (%p331) target = $region36
        $region35: #{tpu_custom_call.1} parent=11 // pred_region
          _
        $region36: #{tpu_custom_call.1} parent=11 // pred_fallthru
          _
        // Predicated region
        $region37: #{tpu_custom_call.1} parent=11 // pred_check
          %p334 = pneg %p184
        $region38: #{tpu_custom_call.1} parent=11 // pred_check_branch
          %336 = sbr.rel (%p334) target = $region40
        $region39: #{tpu_custom_call.1} parent=11 // pred_region
          %s338 = ssub.s32 1024, 1024
          %339 = vsyncadd [#allocation13], %s338
          %s340 = sshll.u32 [#allocation12], 4
          %s341 = int_to_ptr.vmem [resolvable:$true] %s340
          %346 = dma.hbm_to_vmem [thread:$0]  %s6, 1024, %s341, [#allocation13], 64, 64, 4
        $region40: #{tpu_custom_call.1} parent=11 // pred_fallthru
          _
        // Predicated region
        $region41: #{tpu_custom_call.1} parent=11 // pred_check
          %p347 = pneg %p205
        $region42: #{tpu_custom_call.1} parent=11 // pred_check_branch
          %349 = sbr.rel (%p347) target = $region44
        $region43: #{tpu_custom_call.1} parent=11 // pred_region
          _
        $region44: #{tpu_custom_call.1} parent=11 // pred_fallthru
          _
        // Predicated region
        $region45: #{tpu_custom_call.1} parent=11 // pred_check
          %p350 = pneg %p226
        $region46: #{tpu_custom_call.1} parent=11 // pred_check_branch
          %352 = sbr.rel (%p350) target = $region48
        $region47: #{tpu_custom_call.1} parent=11 // pred_region
          %s354 = ssub.s32 1024, 1024
          %355 = vsyncadd [#allocation13], %s354
          %s356 = sshll.u32 [#allocation14], 4
          %s357 = int_to_ptr.vmem [resolvable:$true] %s356
          %362 = dma.hbm_to_vmem [thread:$0]  %s8, 1024, %s357, [#allocation13], 64, 64, 4
        $region48: #{tpu_custom_call.1} parent=11 // pred_fallthru
          _
        // Predicated region
        $region49: #{tpu_custom_call.1} parent=11 // pred_check
          %p363 = pneg %p247
        $region50: #{tpu_custom_call.1} parent=11 // pred_check_branch
          %365 = sbr.rel (%p363) target = $region52
        $region51: #{tpu_custom_call.1} parent=11 // pred_region
          _
        $region52: #{tpu_custom_call.1} parent=11 // pred_fallthru
          _
      $region12: #{tpu_custom_call.1} parent=5 // pred_fallthru
        _
      %p366 = scmp.lt.s32.totalorder %s20, 2
      // Predicated region
      $region53: #{tpu_custom_call.1} parent=5 // pred_check
        %p367 = pneg %p366
      $region54: #{tpu_custom_call.1} parent=5 // pred_check_branch
        %369 = sbr.rel (%p367) target = $region56
      $region55: #{tpu_custom_call.1} parent=5 // pred_region
        _
      $region56: #{tpu_custom_call.1} parent=5 // pred_fallthru
        _
      %p370 = scmp.le.s32.totalorder 1, %s20
      %p371 = scmp.lt.s32.totalorder %s20, 3
      %p372 = pnand %p370, %p371
      %p373 = pneg %p372
      // Predicated region
      $region57: #{tpu_custom_call.1} parent=5 // pred_check
        _
      $region58: #{tpu_custom_call.1} parent=5 // pred_check_branch
        %375 = sbr.rel (%p372) target = $region60
      $region59: #{tpu_custom_call.1} parent=5 // pred_region
        %s376 = ssub.s32 %s20, 1
        // Predicated region
        $region61: #{tpu_custom_call.1} parent=59 // pred_check
          %p377 = pneg %p53
        $region62: #{tpu_custom_call.1} parent=59 // pred_check_branch
          %379 = sbr.rel (%p377) target = $region64
        $region63: #{tpu_custom_call.1} parent=59 // pred_region
          %380 = dma.done [#allocation7], 16
        $region64: #{tpu_custom_call.1} parent=59 // pred_fallthru
          _
        // Predicated region
        $region65: #{tpu_custom_call.1} parent=59 // pred_check
          %p381 = pneg %p100
        $region66: #{tpu_custom_call.1} parent=59 // pred_check_branch
          %383 = sbr.rel (%p381) target = $region68
        $region67: #{tpu_custom_call.1} parent=59 // pred_region
          %384 = dma.done [#allocation10], 128
        $region68: #{tpu_custom_call.1} parent=59 // pred_fallthru
          _
        // Predicated region
        $region69: #{tpu_custom_call.1} parent=59 // pred_check
          %p385 = pneg %p121
        $region70: #{tpu_custom_call.1} parent=59 // pred_check_branch
          %387 = sbr.rel (%p385) target = $region72
        $region71: #{tpu_custom_call.1} parent=59 // pred_region
          %388 = dma.done [#allocation10], 1024
        $region72: #{tpu_custom_call.1} parent=59 // pred_fallthru
          _
        // Predicated region
        $region73: #{tpu_custom_call.1} parent=59 // pred_check
          %p389 = pneg %p184
        $region74: #{tpu_custom_call.1} parent=59 // pred_check_branch
          %391 = sbr.rel (%p389) target = $region76
        $region75: #{tpu_custom_call.1} parent=59 // pred_region
          %392 = dma.done [#allocation13], 1024
        $region76: #{tpu_custom_call.1} parent=59 // pred_fallthru
          _
        // Predicated region
        $region77: #{tpu_custom_call.1} parent=59 // pred_check
          %p393 = pneg %p226
        $region78: #{tpu_custom_call.1} parent=59 // pred_check_branch
          %395 = sbr.rel (%p393) target = $region80
        $region79: #{tpu_custom_call.1} parent=59 // pred_region
          %396 = dma.done [#allocation13], 1024
        $region80: #{tpu_custom_call.1} parent=59 // pred_fallthru
          _
        %p397 = pneg %p53
        %p398 = pneg %p50
        %p399 = pneg %p74
        %p400 = pneg %p71
        %p401 = pneg %p100
        %p402 = pneg %p97
        %p403 = pneg %p121
        %p404 = pneg %p118
        %p405 = pneg %p142
        %p406 = pneg %p139
        %p407 = pneg %p163
        %p408 = pneg %p160
        %p409 = pneg %p184
        %p410 = pneg %p181
        %p411 = pneg %p205
        %p412 = pneg %p202
        %p413 = pneg %p226
        %p414 = pneg %p223
        %p415 = pneg %p247
        %p416 = pneg %p244
        %p417 = pneg %p273
        %p418 = pneg %p270
        %v420 = vld [vmem:[#allocation9] sm:$0xff]
        %v421 = vld [vmem:[#allocation6] sm:$0x1]
        %v423 = vlaneseq
        %v424 = vshrl.u32 %v423, 7
        %v425 = vsub.s32 0, %v424
        %v426 = vrot.slane %v421, %v425
        %v428 = vmul.f32 %v420, %v426
        %v429 = vld [vmem:[%s1] sm:$0x1]
        %v431 = vlaneseq
        %v432 = vshrl.u32 %v431, 7
        %v433 = vsub.s32 0, %v432
        %v434 = vrot.slane %v429, %v433
        %v436 = vadd.f32 %v428, %v434
        %v437 = vmax.f32 %v436, 0.0
        %v438 = vpack.c.bf16 %v437, %v437
        %v439 = vld [vmem:[#allocation11] sm:$0xf]
        %v440 = vld [vmem:[#allocation11 + $0x4] sm:$0xf]
        %v441 = vld [vmem:[#allocation11 + $0x8] sm:$0xf]
        %v442 = vld [vmem:[#allocation11 + $0xc] sm:$0xf]
        %v443 = vld [vmem:[#allocation11 + $0x10] sm:$0xf]
        %v444 = vld [vmem:[#allocation11 + $0x14] sm:$0xf]
        %v445 = vld [vmem:[#allocation11 + $0x18] sm:$0xf]
        %v446 = vld [vmem:[#allocation11 + $0x1c] sm:$0xf]
        %v447 = vld [vmem:[#allocation11 + $0x20] sm:$0xf]
        %v448 = vld [vmem:[#allocation11 + $0x24] sm:$0xf]
        %v449 = vld [vmem:[#allocation11 + $0x28] sm:$0xf]
        %v450 = vld [vmem:[#allocation11 + $0x2c] sm:$0xf]
        %v451 = vld [vmem:[#allocation11 + $0x30] sm:$0xf]
        %v452 = vld [vmem:[#allocation11 + $0x34] sm:$0xf]
        %v453 = vld [vmem:[#allocation11 + $0x38] sm:$0xf]
        %v454 = vld [vmem:[#allocation11 + $0x3c] sm:$0xf]
        %v471 = vunpack.c.l.b16 %v439
        %v472 = vunpack.c.l.b16 %v440
        %v473 = vunpack.c.l.b16 %v441
        %v474 = vunpack.c.l.b16 %v442
        %v475 = vunpack.c.l.b16 %v443
        %v476 = vunpack.c.l.b16 %v444
        %v477 = vunpack.c.l.b16 %v445
        %v478 = vunpack.c.l.b16 %v446
        %v479 = vunpack.c.l.b16 %v447
        %v480 = vunpack.c.l.b16 %v448
        %v481 = vunpack.c.l.b16 %v449
        %v482 = vunpack.c.l.b16 %v450
        %v483 = vunpack.c.l.b16 %v451
        %v484 = vunpack.c.l.b16 %v452
        %v485 = vunpack.c.l.b16 %v453
        %v486 = vunpack.c.l.b16 %v454
        %v487 = vpack.c.b16 %v472, %v471
        %v488 = vpack.c.b16 %v474, %v473
        %v489 = vpack.c.b16 %v476, %v475
        %v490 = vpack.c.b16 %v478, %v477
        %v491 = vpack.c.b16 %v480, %v479
        %v492 = vpack.c.b16 %v482, %v481
        %v493 = vpack.c.b16 %v484, %v483
        %v494 = vpack.c.b16 %v486, %v485
        %503 = vmatprep.subr.bf16.mxu0 0
        %504 = vmatpush1.bf16.msra.mxu0 %v487
        %505 = vmatprep.subr.bf16.mxu0 0
        %506 = vmatpush1.bf16.msra.mxu0 %v488
        %507 = vmatprep.subr.bf16.mxu0 0
        %508 = vmatpush1.bf16.msra.mxu0 %v489
        %509 = vmatprep.subr.bf16.mxu0 0
        %510 = vmatpush1.bf16.msra.mxu0 %v490
        %511 = vmatprep.subr.bf16.mxu0 0
        %512 = vmatpush1.bf16.msra.mxu0 %v491
        %513 = vmatprep.subr.bf16.mxu0 0
        %514 = vmatpush1.bf16.msra.mxu0 %v492
        %515 = vmatprep.subr.bf16.mxu0 0
        %516 = vmatpush1.bf16.msra.mxu0 %v493
        %517 = vmatprep.subr.bf16.mxu0 0
        %518 = vmatpush1.bf16.msra.mxu0 %v494
        %519 = vmatprep.subr.bf16.mxu0 0
        %520 = vmatpush1.bf16.msra.mxu0 0
        %521 = vmatprep.subr.bf16.mxu0 0
        %522 = vmatpush1.bf16.msra.mxu0 0
        %523 = vmatprep.subr.bf16.mxu0 0
        %524 = vmatpush1.bf16.msra.mxu0 0
        %525 = vmatprep.subr.bf16.mxu0 0
        %526 = vmatpush1.bf16.msra.mxu0 0
        %527 = vmatprep.subr.bf16.mxu0 0
        %528 = vmatpush1.bf16.msra.mxu0 0
        %529 = vmatprep.subr.bf16.mxu0 0
        %530 = vmatpush1.bf16.msra.mxu0 0
        %531 = vmatprep.subr.bf16.mxu0 0
        %532 = vmatpush1.bf16.msra.mxu0 0
        %533 = vmatprep.subr.bf16.mxu0 0
        %534 = vmatpush1.bf16.msra.mxu0 0
        %535 = vmatprep.mubr.bf16.mxu0 0
        %536 = vmatmul.mubr.bf16.gmra.mrb[0].mxu0 %v438
        %v537 = vpop.f32.mrb[0].mxu0
        %v538 = vadd.f32 0.0, %v537
        %v539 = vpop.f32.mrb[0].mxu0
        %v540 = vpop.f32.mrb[0].mxu0
        %v541 = vpop.f32.mrb[0].mxu0
        %542 = vdwg.mxu0
        %p543 = scmp.eq.s32.totalorder %s29, 0
        %p544 = scmp.eq.s32.totalorder %s30, 0
        %p545 = pnand %p543, %p544
        %p546 = pneg %p545
        // Predicated region
        $region81: #{tpu_custom_call.1} parent=59 // pred_check
          _
        $region82: #{tpu_custom_call.1} parent=59 // pred_check_branch
          %548 = sbr.rel (%p545) target = $region84
        $region83: #{tpu_custom_call.1} parent=59 // pred_region
          %549 = vst [vmem:[#allocation2] sm:$0x1] 0.0
          %550 = vst [vmem:[#allocation3] sm:$0x1] 0.0
        $region84: #{tpu_custom_call.1} parent=59 // pred_fallthru
          _
        // Predicated region
        $region85: #{tpu_custom_call.1} parent=59 // pred_check
          %p551 = pneg %p543
        $region86: #{tpu_custom_call.1} parent=59 // pred_check_branch
          %553 = sbr.rel (%p551) target = $region88
        $region87: #{tpu_custom_call.1} parent=59 // pred_region
          %v554 = vld [vmem:[#allocation2] sm:$0x1]
          %v555 = vrot.slane %v538, 4
          %v556 = vadd.f32 %v538, %v555
          %v557 = vrot.slane %v556, 2
          %v558 = vadd.f32 %v556, %v557
          %v559 = vrot.slane %v558, 1
          %v560 = vadd.f32 %v558, %v559
          %v561 = vadd.f32 %v554, %v560
          %562 = vst [vmem:[#allocation2] sm:$0x1] %v561
          %v563 = vld [vmem:[#allocation3] sm:$0x1]
          %v564 = vmul.f32 %v538, %v538
          %v565 = vrot.slane %v564, 4
          %v566 = vadd.f32 %v564, %v565
          %v567 = vrot.slane %v566, 2
          %v568 = vadd.f32 %v566, %v567
          %v569 = vrot.slane %v568, 1
          %v570 = vadd.f32 %v568, %v569
          %v571 = vadd.f32 %v563, %v570
          %572 = vst [vmem:[#allocation3] sm:$0x1] %v571
          %573 = vst [vmem:[#allocation15] sm:$0xff] 0.0
        $region88: #{tpu_custom_call.1} parent=59 // pred_fallthru
          _
        %p574 = scmp.eq.s32.totalorder %s29, 1
        %p575 = pnand %p574, %p544
        %p576 = pneg %p575
        // Predicated region
        $region89: #{tpu_custom_call.1} parent=59 // pred_check
          _
        $region90: #{tpu_custom_call.1} parent=59 // pred_check_branch
          %578 = sbr.rel (%p575) target = $region92
        $region91: #{tpu_custom_call.1} parent=59 // pred_region
          %v579 = vld [vmem:[#allocation2] sm:$0x1]
          %v580 = vmul.f32 %v579, 0.125
          %v581 = vld [vmem:[#allocation3] sm:$0x1]
          %v582 = vmul.f32 %v581, 0.125
          %v583 = vmul.f32 %v580, %v580
          %v584 = vsub.f32 %v582, %v583
          %v585 = vld [vmem:[%s4] sm:$0x1]
          %v586 = vadd.f32 %v584, 1e-05
          %v587 = vrsqrt.pop %v586
          %v588 = vmul.f32 %v585, %v587
          %589 = vst [vmem:[#allocation4] sm:$0x1] %v588
          %v590 = vld [vmem:[%s5] sm:$0x1]
          %v591 = vmul.f32 %v580, %v588
          %v592 = vsub.f32 %v590, %v591
          %593 = vst [vmem:[#allocation5] sm:$0x1] %v592
        $region92: #{tpu_custom_call.1} parent=59 // pred_fallthru
          _
        // Predicated region
        $region93: #{tpu_custom_call.1} parent=59 // pred_check
          %p594 = pneg %p574
        $region94: #{tpu_custom_call.1} parent=59 // pred_check_branch
          %596 = sbr.rel (%p594) target = $region96
        $region95: #{tpu_custom_call.1} parent=59 // pred_region
          %v597 = vld [vmem:[#allocation4] sm:$0x1]
          %v599 = vlaneseq
          %v600 = vshrl.u32 %v599, 7
          %v601 = vsub.s32 0, %v600
          %v602 = vrot.slane %v597, %v601
          %v604 = vmul.f32 %v538, %v602
          %v605 = vld [vmem:[#allocation5] sm:$0x1]
          %v607 = vlaneseq
          %v608 = vshrl.u32 %v607, 7
          %v609 = vsub.s32 0, %v608
          %v610 = vrot.slane %v605, %v609
          %v612 = vadd.f32 %v604, %v610
          %v613 = vmax.f32 %v612, 0.0
          %v614 = vpack.c.bf16 %v613, %v613
          %v615 = vld [vmem:[#allocation12] sm:$0xf]
          %v616 = vld [vmem:[#allocation12 + $0x4] sm:$0xf]
          %v617 = vld [vmem:[#allocation12 + $0x8] sm:$0xf]
          %v618 = vld [vmem:[#allocation12 + $0xc] sm:$0xf]
          %v619 = vld [vmem:[#allocation12 + $0x10] sm:$0xf]
          %v620 = vld [vmem:[#allocation12 + $0x14] sm:$0xf]
          %v621 = vld [vmem:[#allocation12 + $0x18] sm:$0xf]
          %v622 = vld [vmem:[#allocation12 + $0x1c] sm:$0xf]
          %v623 = vld [vmem:[#allocation12 + $0x20] sm:$0xf]
          %v624 = vld [vmem:[#allocation12 + $0x24] sm:$0xf]
          %v625 = vld [vmem:[#allocation12 + $0x28] sm:$0xf]
          %v626 = vld [vmem:[#allocation12 + $0x2c] sm:$0xf]
          %v627 = vld [vmem:[#allocation12 + $0x30] sm:$0xf]
          %v628 = vld [vmem:[#allocation12 + $0x34] sm:$0xf]
          %v629 = vld [vmem:[#allocation12 + $0x38] sm:$0xf]
          %v630 = vld [vmem:[#allocation12 + $0x3c] sm:$0xf]
          %v631 = vld [vmem:[%s7] sm:$0x1]
          %v633 = vlaneseq
          %v634 = vshrl.u32 %v633, 7
          %v635 = vsub.s32 0, %v634
          %v636 = vrot.slane %v631, %v635
          %v654 = vunpack.c.l.b16 %v615
          %v655 = vunpack.c.l.b16 %v616
          %v656 = vunpack.c.l.b16 %v617
          %v657 = vunpack.c.l.b16 %v618
          %v658 = vunpack.c.l.b16 %v619
          %v659 = vunpack.c.l.b16 %v620
          %v660 = vunpack.c.l.b16 %v621
          %v661 = vunpack.c.l.b16 %v622
          %v662 = vunpack.c.l.b16 %v623
          %v663 = vunpack.c.l.b16 %v624
          %v664 = vunpack.c.l.b16 %v625
          %v665 = vunpack.c.l.b16 %v626
          %v666 = vunpack.c.l.b16 %v627
          %v667 = vunpack.c.l.b16 %v628
          %v668 = vunpack.c.l.b16 %v629
          %v669 = vunpack.c.l.b16 %v630
          %v670 = vpack.c.b16 %v655, %v654
          %v671 = vpack.c.b16 %v657, %v656
          %v672 = vpack.c.b16 %v659, %v658
          %v673 = vpack.c.b16 %v661, %v660
          %v674 = vpack.c.b16 %v663, %v662
          %v675 = vpack.c.b16 %v665, %v664
          %v676 = vpack.c.b16 %v667, %v666
          %v677 = vpack.c.b16 %v669, %v668
          %686 = vmatprep.subr.bf16.mxu0 0
          %687 = vmatpush1.bf16.msra.mxu0 %v670
          %688 = vmatprep.subr.bf16.mxu0 0
          %689 = vmatpush1.bf16.msra.mxu0 %v671
          %690 = vmatprep.subr.bf16.mxu0 0
          %691 = vmatpush1.bf16.msra.mxu0 %v672
          %692 = vmatprep.subr.bf16.mxu0 0
          %693 = vmatpush1.bf16.msra.mxu0 %v673
          %694 = vmatprep.subr.bf16.mxu0 0
          %695 = vmatpush1.bf16.msra.mxu0 %v674
          %696 = vmatprep.subr.bf16.mxu0 0
          %697 = vmatpush1.bf16.msra.mxu0 %v675
          %698 = vmatprep.subr.bf16.mxu0 0
          %699 = vmatpush1.bf16.msra.mxu0 %v676
          %700 = vmatprep.subr.bf16.mxu0 0
          %701 = vmatpush1.bf16.msra.mxu0 %v677
          %702 = vmatprep.subr.bf16.mxu0 0
          %703 = vmatpush1.bf16.msra.mxu0 0
          %704 = vmatprep.subr.bf16.mxu0 0
          %705 = vmatpush1.bf16.msra.mxu0 0
          %706 = vmatprep.subr.bf16.mxu0 0
          %707 = vmatpush1.bf16.msra.mxu0 0
          %708 = vmatprep.subr.bf16.mxu0 0
          %709 = vmatpush1.bf16.msra.mxu0 0
          %710 = vmatprep.subr.bf16.mxu0 0
          %711 = vmatpush1.bf16.msra.mxu0 0
          %712 = vmatprep.subr.bf16.mxu0 0
          %713 = vmatpush1.bf16.msra.mxu0 0
          %714 = vmatprep.subr.bf16.mxu0 0
          %715 = vmatpush1.bf16.msra.mxu0 0
          %716 = vmatprep.subr.bf16.mxu0 0
          %717 = vmatpush1.bf16.msra.mxu0 0
          %718 = vmatprep.mubr.bf16.mxu0 0
          %719 = vmatmul.mubr.bf16.gmra.mrb[0].mxu0 %v614
          %v720 = vpop.f32.mrb[0].mxu0
          %v721 = vadd.f32 %v636, %v720
          %v722 = vpop.f32.mrb[0].mxu0
          %v723 = vpop.f32.mrb[0].mxu0
          %v724 = vpop.f32.mrb[0].mxu0
          %725 = vdwg.mxu0
          %v726 = vpack.c.bf16 %v420, %v420
          %v727 = vld [vmem:[#allocation14] sm:$0xf]
          %v728 = vld [vmem:[#allocation14 + $0x4] sm:$0xf]
          %v729 = vld [vmem:[#allocation14 + $0x8] sm:$0xf]
          %v730 = vld [vmem:[#allocation14 + $0xc] sm:$0xf]
          %v731 = vld [vmem:[#allocation14 + $0x10] sm:$0xf]
          %v732 = vld [vmem:[#allocation14 + $0x14] sm:$0xf]
          %v733 = vld [vmem:[#allocation14 + $0x18] sm:$0xf]
          %v734 = vld [vmem:[#allocation14 + $0x1c] sm:$0xf]
          %v735 = vld [vmem:[#allocation14 + $0x20] sm:$0xf]
          %v736 = vld [vmem:[#allocation14 + $0x24] sm:$0xf]
          %v737 = vld [vmem:[#allocation14 + $0x28] sm:$0xf]
          %v738 = vld [vmem:[#allocation14 + $0x2c] sm:$0xf]
          %v739 = vld [vmem:[#allocation14 + $0x30] sm:$0xf]
          %v740 = vld [vmem:[#allocation14 + $0x34] sm:$0xf]
          %v741 = vld [vmem:[#allocation14 + $0x38] sm:$0xf]
          %v742 = vld [vmem:[#allocation14 + $0x3c] sm:$0xf]
          %v743 = vld [vmem:[%s9] sm:$0x1]
          %v745 = vlaneseq
          %v746 = vshrl.u32 %v745, 7
          %v747 = vsub.s32 0, %v746
          %v748 = vrot.slane %v743, %v747
          %v766 = vunpack.c.l.b16 %v727
          %v767 = vunpack.c.l.b16 %v728
          %v768 = vunpack.c.l.b16 %v729
          %v769 = vunpack.c.l.b16 %v730
          %v770 = vunpack.c.l.b16 %v731
          %v771 = vunpack.c.l.b16 %v732
          %v772 = vunpack.c.l.b16 %v733
          %v773 = vunpack.c.l.b16 %v734
          %v774 = vunpack.c.l.b16 %v735
          %v775 = vunpack.c.l.b16 %v736
          %v776 = vunpack.c.l.b16 %v737
          %v777 = vunpack.c.l.b16 %v738
          %v778 = vunpack.c.l.b16 %v739
          %v779 = vunpack.c.l.b16 %v740
          %v780 = vunpack.c.l.b16 %v741
          %v781 = vunpack.c.l.b16 %v742
          %v782 = vpack.c.b16 %v767, %v766
          %v783 = vpack.c.b16 %v769, %v768
          %v784 = vpack.c.b16 %v771, %v770
          %v785 = vpack.c.b16 %v773, %v772
          %v786 = vpack.c.b16 %v775, %v774
          %v787 = vpack.c.b16 %v777, %v776
          %v788 = vpack.c.b16 %v779, %v778
          %v789 = vpack.c.b16 %v781, %v780
          %798 = vmatprep.subr.bf16.mxu0 0
          %799 = vmatpush1.bf16.msra.mxu0 %v782
          %800 = vmatprep.subr.bf16.mxu0 0
          %801 = vmatpush1.bf16.msra.mxu0 %v783
          %802 = vmatprep.subr.bf16.mxu0 0
          %803 = vmatpush1.bf16.msra.mxu0 %v784
          %804 = vmatprep.subr.bf16.mxu0 0
          %805 = vmatpush1.bf16.msra.mxu0 %v785
          %806 = vmatprep.subr.bf16.mxu0 0
          %807 = vmatpush1.bf16.msra.mxu0 %v786
          %808 = vmatprep.subr.bf16.mxu0 0
          %809 = vmatpush1.bf16.msra.mxu0 %v787
          %810 = vmatprep.subr.bf16.mxu0 0
          %811 = vmatpush1.bf16.msra.mxu0 %v788
          %812 = vmatprep.subr.bf16.mxu0 0
          %813 = vmatpush1.bf16.msra.mxu0 %v789
          %814 = vmatprep.subr.bf16.mxu0 0
          %815 = vmatpush1.bf16.msra.mxu0 0
          %816 = vmatprep.subr.bf16.mxu0 0
          %817 = vmatpush1.bf16.msra.mxu0 0
          %818 = vmatprep.subr.bf16.mxu0 0
          %819 = vmatpush1.bf16.msra.mxu0 0
          %820 = vmatprep.subr.bf16.mxu0 0
          %821 = vmatpush1.bf16.msra.mxu0 0
          %822 = vmatprep.subr.bf16.mxu0 0
          %823 = vmatpush1.bf16.msra.mxu0 0
          %824 = vmatprep.subr.bf16.mxu0 0
          %825 = vmatpush1.bf16.msra.mxu0 0
          %826 = vmatprep.subr.bf16.mxu0 0
          %827 = vmatpush1.bf16.msra.mxu0 0
          %828 = vmatprep.subr.bf16.mxu0 0
          %829 = vmatpush1.bf16.msra.mxu0 0
          %830 = vmatprep.mubr.bf16.mxu0 0
          %831 = vmatmul.mubr.bf16.gmra.mrb[0].mxu0 %v726
          %v832 = vpop.f32.mrb[0].mxu0
          %v833 = vadd.f32 %v748, %v832
          %v834 = vpop.f32.mrb[0].mxu0
          %v835 = vpop.f32.mrb[0].mxu0
          %v836 = vpop.f32.mrb[0].mxu0
          %837 = vdwg.mxu0
          %v838 = vadd.f32 %v721, %v833
          %839 = vst [vmem:[#allocation15] sm:$0xff] %v838
        $region96: #{tpu_custom_call.1} parent=59 // pred_fallthru
          _
        // Predicated region
        $region97: #{tpu_custom_call.1} parent=59 // pred_check
          %p840 = pneg %p270
        $region98: #{tpu_custom_call.1} parent=59 // pred_check_branch
          %842 = sbr.rel (%p840) target = $region100
        $region99: #{tpu_custom_call.1} parent=59 // pred_region
          %s844 = ssub.s32 128, 128
          %845 = vsyncadd [#allocation8], %s844
          %s846 = smul.addr %s30, 128
          %s847 = scalar_lea.hbm %s10, %s846
          %s849 = sshll.u32 [#allocation15], 4
          %s850 = int_to_ptr.vmem [resolvable:$true] %s849
          %852 = dma.vmem_to_hbm [thread:$0]  %s850, 128, %s847, [#allocation8]
        $region100: #{tpu_custom_call.1} parent=59 // pred_fallthru
          _
        // Predicated region
        $region101: #{tpu_custom_call.1} parent=59 // pred_check
          %p853 = pneg %p270
        $region102: #{tpu_custom_call.1} parent=59 // pred_check_branch
          %855 = sbr.rel (%p853) target = $region104
        $region103: #{tpu_custom_call.1} parent=59 // pred_region
          %856 = dma.done [#allocation8], 128
        $region104: #{tpu_custom_call.1} parent=59 // pred_fallthru
          _
      $region60: #{tpu_custom_call.1} parent=5 // pred_fallthru
        _
      %p857 = scmp.le.s32.totalorder 2, %s20
      // Predicated region
      $region105: #{tpu_custom_call.1} parent=5 // pred_check
        %p858 = pneg %p857
      $region106: #{tpu_custom_call.1} parent=5 // pred_check_branch
        %860 = sbr.rel (%p858) target = $region108
      $region107: #{tpu_custom_call.1} parent=5 // pred_region
        %s861 = ssub.s32 %s20, 2
      $region108: #{tpu_custom_call.1} parent=5 // pred_fallthru
        _
    $region6: #{tpu_custom_call.1} parent=1 // loop_footer
      %s24 = sadd.s32 1, %s20
    $region7: #{tpu_custom_call.1} parent=1 // loop_footer_branch
      %19 = sbr.rel target = $region3
    $region8: #{tpu_custom_call.1} parent=1 // loop_exit
      _
    %862 = vsyncpa [#allocation7], 1
    %s863 = scalar_lea.sflag [#allocation7], 1
    %864 = vsyncpa %s863, 1
    %865 = vsyncpa [#allocation10], 1
    %866 = vsyncpa [#allocation13], 1
    %867 = vsyncpa [#allocation8], 1
    %s868 = scalar_lea.sflag [#allocation8], 1
    %869 = vsyncpa %s868, 1

</llo_original>
